<compile_context>
chip_gen: v6e
topology: v6e:2x2x1
jax: 0.10.0
libtpu: 0.0.40
codegen_flags: <defaults>
</compile_context>

<pallas_src>
import jax
import jax.numpy as jnp
from jax.experimental import pallas as pl
from jax.experimental.pallas import tpu as pltpu


def _make_shuffle_kernel(groups: int, hw: int, tb: int, aligned: bool):
    """Kernel copying (tb, groups, tc, hw) -> (tb, tc, groups*hw).

    The channel permutation is realized by placing source group g into the
    contiguous lane range [g*hw, (g+1)*hw) of the merged output row.  When hw is
    a multiple of 128 the per-group stores are lane-aligned full `vst`s; otherwise
    a single lane-dim concatenate builds the merged row before one full store.
    """
    def kernel(x_ref, o_ref):
        for bi in range(tb):
            if aligned:
                for g in range(groups):
                    o_ref[bi, :, g * hw:(g + 1) * hw] = x_ref[bi, g, :, :]
            else:
                o_ref[bi, :, :] = jnp.concatenate(
                    [x_ref[bi, g, :, :] for g in range(groups)], axis=-1)
    return kernel


def _pick_tc(cpg: int, row_bytes: int, sub: int, target_bytes: int) -> int:
    """Channel rows per block; block_bytes = tc * row_bytes ~ target_bytes."""
    if cpg * row_bytes <= target_bytes or cpg <= sub:
        return cpg  # whole extent: exempt from the sublane-multiple rule
    t = min((target_bytes // row_bytes) // sub * sub, (cpg // sub) * sub)
    t = max(int(t), sub)
    # Prefer an exact divisor of cpg (no partial edge block).
    for d in range(t, sub - 1, -sub):
        if cpg % d == 0:
            return d
    return t  # non-divisor: last block is partial; Pallas masks OOB writes


def channel_shuffle(x, groups: int = 2, *,
                    target_block_bytes: int = 2 << 20,
                    small_bytes: int = 2 << 20):
    """Pallas implementation of SimpleChannelShuffle.forward (NCHW input)."""
    b, c, h, w = x.shape
    assert c % groups == 0, "channels must be divisible by groups"
    if groups == 1:
        return x

    cpg = c // groups
    hw = h * w
    itemsize = jnp.dtype(x.dtype).itemsize
    total_bytes = b * c * hw * itemsize
    aligned = (hw % 128 == 0)
    cost = pl.CostEstimate(flops=0, transcendentals=0,
                           bytes_accessed=2 * total_bytes)

    x4 = x.reshape(b, groups, cpg, hw)                       # contiguous view
    out_shape = jax.ShapeDtypeStruct((b, cpg, groups * hw), x.dtype)

    if total_bytes <= small_bytes:
        # Single-block path: whole tensor in one read DMA + one write DMA.
        y3 = pl.pallas_call(
            _make_shuffle_kernel(groups, hw, b, aligned),
            out_shape=out_shape,
            grid=(1,),
            in_specs=[pl.BlockSpec((b, groups, cpg, hw),
                                   lambda i: (0, 0, 0, 0))],
            out_specs=pl.BlockSpec((b, cpg, groups * hw),
                                   lambda i: (0, 0, 0)),
            compiler_params=pltpu.CompilerParams(
                dimension_semantics=("arbitrary",),
                vmem_limit_bytes=int(min(max(5 * total_bytes, 16 << 20),
                                         32 << 20))),
            cost_estimate=cost,
        )(x4)
        return y3.reshape(b, c, h, w)                        # contiguous view

    # Tiled path: fused (batch x channel-tile) parallel grid, merged output rows.
    sub = max(8, 32 // itemsize)            # dtype-aware sublane packing multiple
    row_bytes = groups * hw * itemsize      # bytes per cpg-row across all groups
    tc = _pick_tc(cpg, row_bytes, sub, target_block_bytes)
    n_ci = pl.cdiv(cpg, tc)
    block_bytes = tc * row_bytes
    vmem_limit = int(min(max(5 * block_bytes, 16 << 20), 32 << 20))
    # TODO(synk): pathologically large spatial maps (groups*hw*itemsize >~ 1 MiB)
    # would additionally need an hw tile; not needed for realistic shuffle layers.

    in_spec = pl.BlockSpec((1, groups, tc, hw),
                           lambda i: (i // n_ci, 0, i % n_ci, 0))
    out_spec = pl.BlockSpec((1, tc, groups * hw),
                            lambda i: (i // n_ci, i % n_ci, 0))

    y3 = pl.pallas_call(
        _make_shuffle_kernel(groups, hw, 1, aligned),
        out_shape=out_shape,
        grid=(b * n_ci,),
        in_specs=[in_spec],
        out_specs=out_spec,
        compiler_params=pltpu.CompilerParams(
            dimension_semantics=("parallel",),
            vmem_limit_bytes=vmem_limit),
        cost_estimate=cost,
    )(x4)
    return y3.reshape(b, c, h, w)                            # contiguous view


def channel_shuffle_ref(x, groups: int = 2):
    """Pure-JAX reference mirroring the PyTorch view/transpose/view."""
    b, c, h, w = x.shape
    cpg = c // groups
    y = x.reshape(b, groups, cpg, h, w)
    y = jnp.transpose(y, (0, 2, 1, 3, 4))
    return y.reshape(b, c, h, w)


if __name__ == "__main__":
    groups = 2  # module default

    # 1) Primary small shape consistent with the module (single-block path).
    x1 = jax.random.normal(jax.random.PRNGKey(0), (2, 4, 16, 16), dtype=jnp.float32)
    o1 = jax.block_until_ready(channel_shuffle(x1, groups))
    e1 = channel_shuffle_ref(x1, groups)
    assert o1.shape == e1.shape and o1.dtype == e1.dtype
    assert jnp.array_equal(o1, e1), "mismatch: shape 1"

    # 2) Multi-channel bf16 input, hw == 128 (single-block path, packed dtype).
    x2 = jax.random.normal(jax.random.PRNGKey(1), (2, 32, 8, 16), dtype=jnp.bfloat16)
    o2 = jax.block_until_ready(channel_shuffle(x2, groups))
    assert jnp.array_equal(o2, channel_shuffle_ref(x2, groups)), "mismatch: shape 2"

    # 3) Larger tensor exercising the tiled merged-groups path (grid = b * n_ci).
    x3 = jax.random.normal(jax.random.PRNGKey(2), (2, 96, 64, 64), dtype=jnp.float32)
    o3 = jax.block_until_ready(channel_shuffle(x3, groups))
    assert jnp.array_equal(o3, channel_shuffle_ref(x3, groups)), "mismatch: shape 3"

    # 4) cpg not divisible by tc (partial edge block) and hw not a multiple of
    #    128 (concatenate path), with tiling forced via small block/small-path
    #    thresholds.
    x4 = jax.random.normal(jax.random.PRNGKey(3), (1, 72, 12, 5), dtype=jnp.float32)
    o4 = jax.block_until_ready(
        channel_shuffle(x4, groups, target_block_bytes=4096, small_bytes=0))
    assert jnp.array_equal(o4, channel_shuffle_ref(x4, groups)), "mismatch: shape 4"

    print("KERNEL_OK")
</pallas_src>

<mosaic_0001>
module attributes {stable_mosaic.version = 11 : i64} {
  func.func @kernel(%arg0: i32, %arg1: memref<2x2x2x256xf32, #tpu.memory_space<vmem>>, %arg2: memref<2x2x512xf32, #tpu.memory_space<vmem>>) attributes {dimension_semantics = [#tpu.dimension_semantics<arbitrary>], iteration_bounds = array<i64: 1>, scalar_prefetch = 0 : i64, scratch_operands = 0 : i64, tpu.core_type = #tpu.core_type<tc>, window_params = [{pipeline_mode = #tpu.pipeline_mode<synchronous>, transform_indices = @transform_0, window_bounds = array<i64: 2, 2, 2, 256>}, {pipeline_mode = #tpu.pipeline_mode<synchronous>, transform_indices = @transform_1, window_bounds = array<i64: 2, 2, 512>}]} {
    %c0 = arith.constant 0 : index
    %c0_0 = arith.constant 0 : index
    %c0_1 = arith.constant 0 : index
    %c0_2 = arith.constant 0 : index
    %0 = vector.load %arg1[%c0, %c0_0, %c0_1, %c0_2] : memref<2x2x2x256xf32, #tpu.memory_space<vmem>>, vector<1x1x2x256xf32>
    %1 = vector.shape_cast %0 : vector<1x1x2x256xf32> to vector<2x256xf32>
    %c0_3 = arith.constant 0 : index
    %c0_4 = arith.constant 0 : index
    %c0_5 = arith.constant 0 : index
    %2 = vector.load %arg2[%c0_3, %c0_4, %c0_5] : memref<2x2x512xf32, #tpu.memory_space<vmem>>, vector<1x2x256xf32>
    %3 = vector.shape_cast %2 : vector<1x2x256xf32> to vector<2x256xf32>
    %4 = vector.shape_cast %1 : vector<2x256xf32> to vector<1x2x256xf32>
    tpu.vector_store %arg2[%c0_3, %c0_4, %c0_5], %4 {strides = array<i32>} : memref<2x2x512xf32, #tpu.memory_space<vmem>>, vector<1x2x256xf32>,
    %c0_6 = arith.constant 0 : index
    %c1 = arith.constant 1 : index
    %c0_7 = arith.constant 0 : index
    %c0_8 = arith.constant 0 : index
    %5 = vector.load %arg1[%c0_6, %c1, %c0_7, %c0_8] : memref<2x2x2x256xf32, #tpu.memory_space<vmem>>, vector<1x1x2x256xf32>
    %6 = vector.shape_cast %5 : vector<1x1x2x256xf32> to vector<2x256xf32>
    %c0_9 = arith.constant 0 : index
    %c0_10 = arith.constant 0 : index
    %c256 = arith.constant 256 : index
    %7 = vector.load %arg2[%c0_9, %c0_10, %c256] : memref<2x2x512xf32, #tpu.memory_space<vmem>>, vector<1x2x256xf32>
    %8 = vector.shape_cast %7 : vector<1x2x256xf32> to vector<2x256xf32>
    %9 = vector.shape_cast %6 : vector<2x256xf32> to vector<1x2x256xf32>
    tpu.vector_store %arg2[%c0_9, %c0_10, %c256], %9 {strides = array<i32>} : memref<2x2x512xf32, #tpu.memory_space<vmem>>, vector<1x2x256xf32>,
    %c1_11 = arith.constant 1 : index
    %c0_12 = arith.constant 0 : index
    %c0_13 = arith.constant 0 : index
    %c0_14 = arith.constant 0 : index
    %10 = vector.load %arg1[%c1_11, %c0_12, %c0_13, %c0_14] : memref<2x2x2x256xf32, #tpu.memory_space<vmem>>, vector<1x1x2x256xf32>
    %11 = vector.shape_cast %10 : vector<1x1x2x256xf32> to vector<2x256xf32>
    %c1_15 = arith.constant 1 : index
    %c0_16 = arith.constant 0 : index
    %c0_17 = arith.constant 0 : index
    %12 = vector.load %arg2[%c1_15, %c0_16, %c0_17] : memref<2x2x512xf32, #tpu.memory_space<vmem>>, vector<1x2x256xf32>
    %13 = vector.shape_cast %12 : vector<1x2x256xf32> to vector<2x256xf32>
    %14 = vector.shape_cast %11 : vector<2x256xf32> to vector<1x2x256xf32>
    tpu.vector_store %arg2[%c1_15, %c0_16, %c0_17], %14 {strides = array<i32>} : memref<2x2x512xf32, #tpu.memory_space<vmem>>, vector<1x2x256xf32>,
    %c1_18 = arith.constant 1 : index
    %c1_19 = arith.constant 1 : index
    %c0_20 = arith.constant 0 : index
    %c0_21 = arith.constant 0 : index
    %15 = vector.load %arg1[%c1_18, %c1_19, %c0_20, %c0_21] : memref<2x2x2x256xf32, #tpu.memory_space<vmem>>, vector<1x1x2x256xf32>
    %16 = vector.shape_cast %15 : vector<1x1x2x256xf32> to vector<2x256xf32>
    %c1_22 = arith.constant 1 : index
    %c0_23 = arith.constant 0 : index
    %c256_24 = arith.constant 256 : index
    %17 = vector.load %arg2[%c1_22, %c0_23, %c256_24] : memref<2x2x512xf32, #tpu.memory_space<vmem>>, vector<1x2x256xf32>
    %18 = vector.shape_cast %17 : vector<1x2x256xf32> to vector<2x256xf32>
    %19 = vector.shape_cast %16 : vector<2x256xf32> to vector<1x2x256xf32>
    tpu.vector_store %arg2[%c1_22, %c0_23, %c256_24], %19 {strides = array<i32>} : memref<2x2x512xf32, #tpu.memory_space<vmem>>, vector<1x2x256xf32>,
    return
  }
  func.func @transform_0(%arg0: i32) -> (i32, i32, i32, i32) {
    %c0_i32 = arith.constant 0 : i32
    %c0_i32_0 = arith.constant 0 : i32
    %c0_i32_1 = arith.constant 0 : i32
    %c0_i32_2 = arith.constant 0 : i32
    %c0_i32_3 = arith.constant 0 : i32
    return %c0_i32, %c0_i32_0, %c0_i32_1, %c0_i32_2 : i32, i32, i32, i32
  }
  func.func @transform_1(%arg0: i32) -> (i32, i32, i32) {
    %c0_i32 = arith.constant 0 : i32
    %c0_i32_0 = arith.constant 0 : i32
    %c0_i32_1 = arith.constant 0 : i32
    %c0_i32_2 = arith.constant 0 : i32
    return %c0_i32, %c0_i32_0, %c0_i32_1 : i32, i32, i32
  }
}

</mosaic_0001>

<llo_original>
// kernel: tpu_custom_call.1
$region0: #{tpu_custom_call.1}
  #allocation0 [shape = 'u32[]', space=smem, size = 0x4, offset = 0x4, fixed_abs, tag = 'smem constant byte address 0x4 - core index']
  #allocation1 [shape = 'u32[144,128]{1,0:T(1,128)}', space=vmem, size = 0x12000, scoped, tag = 'internal scratch']
  %s0 = inlined_call_operand.hbm [shape: f32[2,2,2,256], index: 0, kind: input, shape index: {}]
  %s1 = inlined_call_operand.hbm [shape: f32[2,2,512], index: 1, kind: output, shape index: {}]
  %s2 = sld [smem:[#allocation0]]
  $region18: #{tpu_custom_call.1} parent=0
    _
  %s4 = ssub.s32 1, %s2
  %s5 = scalar_select 0, %s4, %s2
  $region1: #{tpu_custom_call.1} parent=0
    #allocation2 [shape = 'u8[8192]{0}', space=vmem, size = 0x2000, scoped, tag = 'input window, operand 0, single buffered']
    #allocation3 [shape = 's32[1]{0}', space=sflag, size = 0x4, scoped, tag = 'scoped memory for tpu_custom_call.1']
    #allocation4 [shape = 's32[1]{0}', space=sflag, size = 0x4, scoped, tag = 'scoped memory for tpu_custom_call.1']
    #allocation5 [shape = 'u8[8192]{0}', space=vmem, size = 0x2000, scoped, tag = 'output window, operand 0, single buffered']
    %6 = vsyncpa [#allocation3], 0
    %7 = vsyncpa [#allocation4], 0
    // Predicated region
    $region2: #{tpu_custom_call.1} parent=1 // pred_check
      _
    $region3: #{tpu_custom_call.1} parent=1 // pred_check_branch
      %9 = sbr.rel (0) target = $region5
    $region4: #{tpu_custom_call.1} parent=1 // pred_region
      %s11 = ssub.s32 256, 256
      %12 = vsyncadd [#allocation3], %s11
      %s13 = sshll.u32 [#allocation2], 4
      %s14 = int_to_ptr.vmem [resolvable:$true] %s13
      %19 = dma.hbm_to_vmem [thread:$0]  %s0, 256, %s14, [#allocation3], 64, 64, 4
    $region5: #{tpu_custom_call.1} parent=1 // pred_fallthru
      _
    // Predicated region
    $region6: #{tpu_custom_call.1} parent=1 // pred_check
      _
    $region7: #{tpu_custom_call.1} parent=1 // pred_check_branch
      %21 = sbr.rel (0) target = $region9
    $region8: #{tpu_custom_call.1} parent=1 // pred_region
      %22 = dma.done [#allocation3], 256
    $region9: #{tpu_custom_call.1} parent=1 // pred_fallthru
      _
    %v23 = vld [vmem:[#allocation2] sm:$0xf]
    %24 = vst [vmem:[#allocation5] sm:$0xf] %v23
    %s25 = scalar_lea.vmem [#allocation2], 4
    %v26 = vld [vmem:[%s25] sm:$0xf]
    %27 = vst [vmem:[#allocation5 + $0x4] sm:$0xf] %v26
    %s28 = scalar_lea.vmem [#allocation2], 8
    %v29 = vld [vmem:[%s28] sm:$0xf]
    %s30 = scalar_lea.vmem [#allocation5], 8
    %31 = vst [vmem:[%s30] sm:$0xf] %v29
    %s32 = scalar_lea.vmem [#allocation2], 12
    %v33 = vld [vmem:[%s32] sm:$0xf]
    %34 = vst [vmem:[%s30 + $0x4] sm:$0xf] %v33
    // Predicated region
    $region10: #{tpu_custom_call.1} parent=1 // pred_check
      _
    $region11: #{tpu_custom_call.1} parent=1 // pred_check_branch
      %36 = sbr.rel (0) target = $region13
    $region12: #{tpu_custom_call.1} parent=1 // pred_region
      %s38 = ssub.s32 256, 256
      %39 = vsyncadd [#allocation4], %s38
      %s40 = sshll.u32 [#allocation5], 4
      %s41 = int_to_ptr.vmem [resolvable:$true] %s40
      %46 = dma.vmem_to_hbm [thread:$0]  %s41, 256, %s1, [#allocation4], 128, 128, 8
    $region13: #{tpu_custom_call.1} parent=1 // pred_fallthru
      _
    // Predicated region
    $region14: #{tpu_custom_call.1} parent=1 // pred_check
      _
    $region15: #{tpu_custom_call.1} parent=1 // pred_check_branch
      %48 = sbr.rel (0) target = $region17
    $region16: #{tpu_custom_call.1} parent=1 // pred_region
      %49 = dma.done [#allocation4], 256
    $region17: #{tpu_custom_call.1} parent=1 // pred_fallthru
      _
    %50 = vsyncpa [#allocation3], 1
    %51 = vsyncpa [#allocation4], 1

</llo_original>
